<compile_context>
chip_gen: v7x
topology: tpu7x:2x2x1
jax: 0.10.0
libtpu: 0.0.40
codegen_flags: <defaults>
</compile_context>

<pallas_src>
from functools import partial

import numpy as np
import jax
import jax.numpy as jnp
from jax.experimental import pallas as pl
from jax.experimental.pallas import tpu as pltpu


def _reward_mix_kernel(x_ref, out_ref, *, r):
    # x_ref: (2R, TB) block — batch on lanes; rows [0:R] = rewards, [R:2R] = w.
    x = x_ref[...].astype(jnp.float32)
    # Weighted sum over the reward-component (sublane) axis -> (1, TB), lane-dense.
    out_ref[...] = jnp.sum(x[:r] * x[r:], axis=0, keepdims=True)


def _reward_mix_pallas(rewards, w, *, block_batch=None):
    """rewards, w: (B, R) -> (B, 1) f32, via a single-input Pallas kernel."""
    B, R = rewards.shape

    # One fused HBM pass: cast + concat + transpose -> (2R, B) stacked input.
    dtype = jnp.result_type(rewards.dtype, w.dtype)
    x_t = jnp.transpose(
        jnp.concatenate([rewards.astype(dtype), w.astype(dtype)], axis=1)
    )  # (2R, B)

    itemsize = jnp.dtype(dtype).itemsize
    rows = 2 * R
    # Native sublane tiling: 8 sublanes for 4-byte, 16 for 2-byte, 32 for 1-byte.
    native_sub = 8 * (4 // itemsize)
    rows_pad = ((rows + native_sub - 1) // native_sub) * native_sub

    # Batch tile width: target ~4 MiB *real* (sublane-padded) input block.
    if block_batch is None:
        target_in_bytes = 4 * 1024 * 1024
        tb = max(128, (target_in_bytes // (rows_pad * itemsize)) // 128 * 128)
    else:
        tb = max(128, (block_batch // 128) * 128)

    if tb >= B:
        if B > 128:
            # Keep >= 2 tiles so both v7x TensorCores get work (megacore).
            tb = ((pl.cdiv(B, 2) + 127) // 128) * 128
        else:
            tb = B  # single full-extent block (allowed by Pallas)

    grid = (pl.cdiv(B, tb),)  # ragged: last block partially masked, OOB writes dropped

    # Real (sublane-padded) double-buffered VMEM footprint -> explicit limit.
    in_block_real = rows_pad * tb * itemsize
    out_block_real = 8 * tb * 4  # (1, tb) f32 output pads to 8 sublanes
    footprint = 2 * in_block_real + 2 * out_block_real
    vmem_limit = int(min(max(32 << 20, footprint + (8 << 20)), 56 << 20))

    out = pl.pallas_call(
        partial(_reward_mix_kernel, r=R),
        out_shape=jax.ShapeDtypeStruct((1, B), jnp.float32),
        grid=grid,
        in_specs=[pl.BlockSpec((rows, tb), lambda i: (0, i))],
        out_specs=pl.BlockSpec((1, tb), lambda i: (0, i)),
        compiler_params=pltpu.CompilerParams(
            dimension_semantics=("parallel",),
            vmem_limit_bytes=vmem_limit,
        ),
    )(x_t)

    # (1, B) -> (B, 1); row-major reshape is layout-free.
    return jnp.reshape(out, (B, 1))


def reward_mix(rewards, w, *, force_pallas=False, min_pallas_batch=262144,
               block_batch=None):
    """Weighted reward sum: (B, R) x (B, R) -> (B, 1) f32.

    For small/medium batches the fused XLA multiply-reduce (which also fuses
    with the Dirichlet sampler epilogue) beats the Pallas launch + wrapper
    stacking pass, so only take the Pallas path for very large B unless
    `force_pallas` is set.
    """
    B, _ = rewards.shape
    if not force_pallas and B < min_pallas_batch:
        return jnp.sum(rewards.astype(jnp.float32) * w.astype(jnp.float32),
                       axis=1, keepdims=True)
    return _reward_mix_pallas(rewards, w, block_batch=block_batch)


class RewardMixer:
    """JAX/Pallas port of the PyTorch RewardMixer (reward integrator)."""

    def __init__(self, reward_shape, init_value, final_value, start, period):
        self.reward_shape = reward_shape
        self.init_values = np.ones(reward_shape) * init_value
        self.final_values = np.ones(reward_shape) * final_value
        self.starts = np.arange(reward_shape[0]) * start
        self.periods = np.ones(reward_shape) * period
        self.alphas = self.init_values.copy()
        self.outputs = dict()
        self.last_w = None
        self._pending_w_mean = None  # device array; pulled lazily at log time

    def update(self, step):
        ps = ((step - self.starts) / self.periods).clip(0.0, 1.0)
        dfs = self.final_values - self.init_values
        self.alphas = self.init_values + dfs * ps

    def forward(self, rewards, key, *, force_pallas=False):
        # TODO(synk): Dirichlet (gamma) sampling has no clean in-kernel Pallas
        # equivalent; sampled with jax.random.dirichlet (does not reproduce the
        # original numpy RNG stream bit-for-bit).
        b = rewards.shape[0]
        alphas = jnp.asarray(self.alphas, dtype=jnp.float32)
        w = jax.random.dirichlet(key, alphas, shape=(b,)).astype(jnp.float32)

        # Non-blocking logging: keep the mean on device; host pull deferred
        # to flush_outputs()/log() so forward() never forces a device sync.
        self._pending_w_mean = jnp.mean(w, axis=0)

        self.last_w = w
        return reward_mix(rewards, w, force_pallas=force_pallas)

    def flush_outputs(self):
        for i in range(self.reward_shape[0]):
            self.outputs[f"alpha_{i}"] = float(self.alphas[i])
        if self._pending_w_mean is not None:
            wm = np.asarray(self._pending_w_mean)  # single device->host sync
            for i in range(wm.shape[0]):
                self.outputs[f"weight_{i}"] = float(wm[i])
            self._pending_w_mean = None

    def log(self, logger, step):
        self.flush_outputs()
        for k, v in self.outputs.items():
            logger.log(f"train_mixer/{k}", v, step)


if __name__ == "__main__":
    # Deterministic setup: 4 reward components, batch of 8.
    B, R = 8, 4
    mixer = RewardMixer(
        reward_shape=(R,), init_value=1.0, final_value=0.1, start=1000, period=10000
    )
    mixer.update(step=2500)  # exercises the alpha schedule deterministically

    key = jax.random.PRNGKey(0)
    k_rewards, k_dirichlet = jax.random.split(key)
    rewards = jax.random.normal(k_rewards, (B, R), dtype=jnp.float32)

    out = mixer.forward(rewards, k_dirichlet, force_pallas=True)
    out = jax.block_until_ready(out)
    w = mixer.last_w

    ref = jnp.sum(rewards * w, axis=1, keepdims=True)
    assert out.shape == (B, 1), out.shape
    assert np.allclose(np.asarray(out), np.asarray(ref), rtol=1e-5, atol=1e-5), (
        np.asarray(out), np.asarray(ref))

    # Logging path (single deferred host pull, outside the forward call).
    mixer.flush_outputs()
    assert f"weight_{R-1}" in mixer.outputs

    # Also exercise the ragged multi-tile grid path (tb=128, B=300 ->
    # grid=(3,), last block partially masked) at a small deterministic shape.
    B2 = 300
    k_r2, k_w2 = jax.random.split(jax.random.PRNGKey(1))
    rewards2 = jax.random.normal(k_r2, (B2, R), dtype=jnp.float32)
    alphas2 = jnp.asarray(mixer.alphas, dtype=jnp.float32)
    w2 = jax.random.dirichlet(k_w2, alphas2, shape=(B2,)).astype(jnp.float32)
    out2 = reward_mix(rewards2, w2, force_pallas=True, block_batch=128)
    out2 = jax.block_until_ready(out2)
    ref2 = jnp.sum(rewards2 * w2, axis=1, keepdims=True)
    assert out2.shape == (B2, 1), out2.shape
    assert np.allclose(np.asarray(out2), np.asarray(ref2), rtol=1e-5, atol=1e-5)

    # Auto-sized path with B > 128 (splits into >= 2 tiles for v7x megacore).
    B3 = 513
    k_r3, k_w3 = jax.random.split(jax.random.PRNGKey(2))
    rewards3 = jax.random.normal(k_r3, (B3, R), dtype=jnp.float32)
    w3 = jax.random.dirichlet(k_w3, alphas2, shape=(B3,)).astype(jnp.float32)
    out3 = jax.block_until_ready(reward_mix(rewards3, w3, force_pallas=True))
    ref3 = jnp.sum(rewards3 * w3, axis=1, keepdims=True)
    assert out3.shape == (B3, 1), out3.shape
    assert np.allclose(np.asarray(out3), np.asarray(ref3), rtol=1e-5, atol=1e-5)

    print("KERNEL_OK")
</pallas_src>

<mosaic_0001>
module attributes {stable_mosaic.version = 11 : i64} {
  func.func @_reward_mix_kernel(%arg0: i32, %arg1: memref<8x8xf32, #tpu.memory_space<vmem>>, %arg2: memref<1x8xf32, #tpu.memory_space<vmem>>) attributes {dimension_semantics = [#tpu.dimension_semantics<parallel>], iteration_bounds = array<i64: 1>, scalar_prefetch = 0 : i64, scratch_operands = 0 : i64, tpu.core_type = #tpu.core_type<tc>, window_params = [{transform_indices = @transform_0, window_bounds = array<i64: 8, 8>}, {transform_indices = @transform_1, window_bounds = array<i64: 1, 8>}]} {
    %c0 = arith.constant 0 : index
    %c0_0 = arith.constant 0 : index
    %0 = vector.load %arg1[%c0, %c0_0] : memref<8x8xf32, #tpu.memory_space<vmem>>, vector<8x8xf32>
    %1 = vector.extract_strided_slice %0 {offsets = [0, 0], sizes = [4, 8], strides = [1, 1]} : vector<8x8xf32> to vector<4x8xf32>
    %2 = vector.extract_strided_slice %0 {offsets = [4, 0], sizes = [4, 8], strides = [1, 1]} : vector<8x8xf32> to vector<4x8xf32>
    %3 = arith.mulf %1, %2 : vector<4x8xf32>
    %cst = arith.constant dense<0.000000e+00> : vector<8xf32>
    %4 = vector.multi_reduction <add>, %3, %cst [0] : vector<4x8xf32> to vector<8xf32>
    %5 = vector.shape_cast %4 : vector<8xf32> to vector<1x8xf32>
    %c0_1 = arith.constant 0 : index
    %c0_2 = arith.constant 0 : index
    %6 = vector.load %arg2[%c0_1, %c0_2] : memref<1x8xf32, #tpu.memory_space<vmem>>, vector<1x8xf32>
    tpu.vector_store %arg2[%c0_1, %c0_2], %5 {strides = array<i32>} : memref<1x8xf32, #tpu.memory_space<vmem>>, vector<1x8xf32>,
    return
  }
  func.func @transform_0(%arg0: i32) -> (i32, i32) {
    %c0_i32 = arith.constant 0 : i32
    %c0_i32_0 = arith.constant 0 : i32
    return %c0_i32, %arg0 : i32, i32
  }
  func.func @transform_1(%arg0: i32) -> (i32, i32) {
    %c0_i32 = arith.constant 0 : i32
    %c0_i32_0 = arith.constant 0 : i32
    return %c0_i32, %arg0 : i32, i32
  }
}

</mosaic_0001>

<llo_original>
// kernel: tpu_custom_call.1
$region0: #{tpu_custom_call.1}
  #allocation0 [shape = 'u32[]', space=smem, size = 0x4, offset = 0x4, fixed_abs, tag = 'smem constant byte address 0x4 - core index']
  #allocation1 [shape = 'u32[144,128]{1,0:T(1,128)}', space=vmem, size = 0x12000, scoped, tag = 'internal scratch']
  %s0 = inlined_call_operand.hbm [shape: f32[8,8], index: 0, kind: input, shape index: {}]
  %s1 = inlined_call_operand.hbm [shape: f32[1,8], index: 1, kind: output, shape index: {}]
  %s2 = sld [smem:[#allocation0]]
  $region18: #{tpu_custom_call.1} parent=0
    _
  %s4 = ssub.s32 1, %s2
  %s5 = scalar_select 0, %s4, %s2
  $region1: #{tpu_custom_call.1} parent=0
    #allocation2 [shape = 'u8[4096]{0}', space=vmem, size = 0x1000, scoped, tag = 'input window, operand 0, single buffered']
    #allocation3 [shape = 's32[1]{0}', space=sflag, size = 0x4, scoped, tag = 'scoped memory for tpu_custom_call.1']
    #allocation4 [shape = 's32[1]{0}', space=sflag, size = 0x4, scoped, tag = 'scoped memory for tpu_custom_call.1']
    #allocation5 [shape = 'u8[512]{0}', space=vmem, size = 0x400, scoped, tag = 'output window, operand 0, single buffered']
    %6 = vsyncpa [#allocation3], 0
    %7 = vsyncpa [#allocation4], 0
    // Predicated region
    $region2: #{tpu_custom_call.1} parent=1 // pred_check
      _
    $region3: #{tpu_custom_call.1} parent=1 // pred_check_branch
      %9 = sbr.rel (0) target = $region5
    $region4: #{tpu_custom_call.1} parent=1 // pred_region
      %s11 = ssub.s32 128, 128
      %12 = vsyncadd [#allocation3], %s11
      %s14 = sshll.u32 [#allocation2], 4
      %s15 = int_to_ptr.vmem [resolvable:$true] %s14
      %17 = dma.hbm_to_vmem [thread:$0]  %s0, 128, %s15, [#allocation3]
    $region5: #{tpu_custom_call.1} parent=1 // pred_fallthru
      _
    // Predicated region
    $region6: #{tpu_custom_call.1} parent=1 // pred_check
      _
    $region7: #{tpu_custom_call.1} parent=1 // pred_check_branch
      %19 = sbr.rel (0) target = $region9
    $region8: #{tpu_custom_call.1} parent=1 // pred_region
      %20 = dma.done [#allocation3], 128
    $region9: #{tpu_custom_call.1} parent=1 // pred_fallthru
      _
    %v21 = vld [vmem:[#allocation2] sm:$0xff]
    %v23 = vrot.slane %v21, 4
    %v25 = vmul.f32 %v21, %v23
    %vm26 = vcmask 60416
    %v27 = vsel %vm26, %v25, 0.0
    %v28 = vrot.slane %v27, 4
    %v29 = vadd.f32 %v27, %v28
    %v30 = vrot.slane %v29, 2
    %v31 = vadd.f32 %v29, %v30
    %v32 = vrot.slane %v31, 1
    %v33 = vadd.f32 %v31, %v32
    %vm34 = vcmask 57344
    %35 = vst.msk [vmem:[#allocation5] sm:$0x1] %vm34, %v33
    // Predicated region
    $region10: #{tpu_custom_call.1} parent=1 // pred_check
      _
    $region11: #{tpu_custom_call.1} parent=1 // pred_check_branch
      %37 = sbr.rel (0) target = $region13
    $region12: #{tpu_custom_call.1} parent=1 // pred_region
      %s39 = ssub.s32 16, 16
      %40 = vsyncadd [#allocation4], %s39
      %s42 = sshll.u32 [#allocation5], 4
      %s43 = int_to_ptr.vmem [resolvable:$true] %s42
      %45 = dma.vmem_to_hbm [thread:$0]  %s43, 16, %s1, [#allocation4]
    $region13: #{tpu_custom_call.1} parent=1 // pred_fallthru
      _
    // Predicated region
    $region14: #{tpu_custom_call.1} parent=1 // pred_check
      _
    $region15: #{tpu_custom_call.1} parent=1 // pred_check_branch
      %47 = sbr.rel (0) target = $region17
    $region16: #{tpu_custom_call.1} parent=1 // pred_region
      %48 = dma.done [#allocation4], 16
    $region17: #{tpu_custom_call.1} parent=1 // pred_fallthru
      _
    %49 = vsyncpa [#allocation3], 1
    %50 = vsyncpa [#allocation4], 1

</llo_original>
